<compile_context>
chip_gen: v6e
topology: v6e:2x2x1
jax: 0.10.0
libtpu: 0.0.40
codegen_flags: <defaults>
</compile_context>

<pallas_src>
import functools

import jax
import jax.numpy as jnp
from jax.experimental import pallas as pl
from jax.experimental.pallas import tpu as pltpu

EPS = 1e-5
_DEFAULT_VMEM_LIMIT = 48 * 1024 * 1024   # safe on v7x (64 MiB physical VMEM)
_MAX_VMEM_LIMIT = 96 * 1024 * 1024       # cap for v5e/v6e (128 MiB physical)


def _round_up(x, m):
    return ((x + m - 1) // m) * m


def _round_down(x, m):
    return (x // m) * m


def _vmem_limit_bytes():
    """3/4 of physical VMEM, capped at 96 MiB (v5e/v6e -> 96 MiB, v7x -> 48 MiB)."""
    try:
        cap = pltpu.get_tpu_info().vmem_capacity_bytes
        return int(min(cap * 3 // 4, _MAX_VMEM_LIMIT))
    except Exception:  # off-TPU tracing / older runtimes: conservative default
        return _DEFAULT_VMEM_LIMIT


# ---------------------------------------------------------------------------
# Fused path: whole tensor resident in VMEM (stats + normalize in one kernel)
# ---------------------------------------------------------------------------
def _fused_kernel(x_ref, m_ref, w_ref, b_ref, o_ref, *, eps):
    x = x_ref[...].astype(jnp.float32)                         # (rows, C)
    m = m_ref[...].astype(jnp.float32)                         # (rows, 1)
    xm = x * m                        # mask is 0/1 so (x*m)^2 == x^2 * m
    # n clamped: all-zero mask returns zeros instead of NaN (deliberate
    # divergence from the reference, which would divide by zero).
    n = jnp.maximum(jnp.sum(m, axis=0, keepdims=True), 1.0)    # (1, 1)
    mean = jnp.sum(xm, axis=0, keepdims=True) / n              # (1, C)
    var = jnp.maximum(
        jnp.sum(xm * xm, axis=0, keepdims=True) / n - mean * mean, 0.0)
    inv_std = jax.lax.rsqrt(var + eps)                         # EUP slot
    scale = w_ref[...].astype(jnp.float32) * inv_std
    shift = b_ref[...].astype(jnp.float32) - mean * scale
    o_ref[...] = ((x * scale + shift) * m).astype(o_ref.dtype)


# ---------------------------------------------------------------------------
# Phase 1: streaming per-channel partial sums (split into `n_parts` partials)
# ---------------------------------------------------------------------------
def _stats_kernel(x_ref, m_ref, sx_ref, sx2_ref, *,
                  tile_rows, per_part, rows, need_guard):
    p = pl.program_id(0)   # partial-reduction index ("parallel")
    ri = pl.program_id(1)  # row-tile index within the part ("arbitrary")

    @pl.when(ri == 0)
    def _init():
        sx_ref[...] = jnp.zeros_like(sx_ref)
        sx2_ref[...] = jnp.zeros_like(sx2_ref)

    x = x_ref[...].astype(jnp.float32)   # (tile_rows, C)
    m = m_ref[...].astype(jnp.float32)   # (tile_rows, 1)

    if need_guard:
        # Rows past `rows` (ragged tail of the last block, or whole clamped
        # duplicate tiles when the tile count does not split evenly across
        # parts) must contribute zero.  The HBM overhang is undefined, so we
        # zero both x and m from an iota predicate (garbage*0 can be NaN).
        row0 = (p * per_part + ri) * tile_rows
        rid = row0 + jax.lax.broadcasted_iota(jnp.int32, (tile_rows, 1), 0)
        valid = rid < rows
        m = jnp.where(valid, m, 0.0)
        x = jnp.where(valid, x, 0.0)

    xm = x * m                            # 0/1 mask: (x*m)^2 == x^2 * m
    sx_ref[...] += jnp.sum(xm, axis=0, keepdims=True)[None]        # (1,1,C)
    sx2_ref[...] += jnp.sum(xm * xm, axis=0, keepdims=True)[None]  # (1,1,C)


# ---------------------------------------------------------------------------
# Phase 2: normalize  out = (x * scale + shift) * mask
# ---------------------------------------------------------------------------
def _norm_kernel(x_ref, m_ref, scale_ref, shift_ref, o_ref):
    x = x_ref[...].astype(jnp.float32)
    m = m_ref[...].astype(jnp.float32)
    o_ref[...] = ((x * scale_ref[...] + shift_ref[...]) * m).astype(o_ref.dtype)


def masked_batch_norm_1d(x, input_mask=None, weight=None, bias=None, *,
                         eps=EPS, block_rows=None,
                         fused_threshold_bytes=2 * 1024 * 1024):
    """Training-mode MaskedBatchNorm1d forward.

    x: (B, L, C); input_mask: (B, L, 1) (or (B, L)) of zeros/ones;
    weight/bias: (1, C).  Returns (B, L, C).
    """
    B, L, C = x.shape
    rows = B * L
    itemsize = jnp.dtype(x.dtype).itemsize
    c_pad = _round_up(C, 128)            # lane-padded VMEM footprint of a row
    row_align = max(8, 32 // itemsize)   # sublane multiple: f32 8 / bf16 16 / i8 32

    if weight is None:
        weight = jnp.ones((1, C), jnp.float32)
    if bias is None:
        bias = jnp.zeros((1, C), jnp.float32)
    w2 = jnp.asarray(weight, jnp.float32).reshape(1, C)
    b2 = jnp.asarray(bias, jnp.float32).reshape(1, C)

    x2 = x.reshape(rows, C)              # free reshapes (row-major contiguous)
    if input_mask is None:
        m_col = jnp.ones((rows, 1), x.dtype)
    else:
        m_col = input_mask.reshape(rows, 1).astype(x.dtype)

    vmem_limit = _vmem_limit_bytes()

    # ---- Fused single-pass path --------------------------------------------
    if rows * c_pad * 4 <= fused_threshold_bytes:
        out = pl.pallas_call(
            functools.partial(_fused_kernel, eps=eps),
            out_shape=jax.ShapeDtypeStruct((rows, C), x.dtype),
            compiler_params=pltpu.CompilerParams(vmem_limit_bytes=vmem_limit),
        )(x2, m_col, w2, b2)
        return out.reshape(B, L, C)

    # ---- Tile sizing: full-C lane slabs, rows from a VMEM byte budget -------
    target_block_bytes = vmem_limit // 12    # ~4 MiB on v7x, ~8 MiB on v5e/v6e
    if block_rows is None:
        tile_rows = _round_down(target_block_bytes // (c_pad * itemsize), row_align)
    else:
        tile_rows = _round_down(block_rows, row_align)
    tile_rows = max(row_align, tile_rows)
    if tile_rows >= rows:
        tile_rows = rows
        n_rtiles = 1
    else:
        n_rtiles = pl.cdiv(rows, tile_rows)

    # Split the phase-1 reduction into two independent partial reductions so a
    # megacore chip (v7x) runs phase 1 on both TensorCores.
    n_parts = 2 if n_rtiles >= 2 else 1
    per_part = -(-n_rtiles // n_parts)
    total_tiles = n_parts * per_part
    need_guard = total_tiles * tile_rows != rows

    if total_tiles > n_rtiles:
        def row_block(p, ri):
            # Clamp duplicated trailing tiles in-bounds; the in-kernel iota
            # guard zeroes their contribution.
            return jnp.minimum(p * per_part + ri, n_rtiles - 1)
    else:
        def row_block(p, ri):
            return p * per_part + ri

    # ---- Phase 1: streaming per-channel partial sums ------------------------
    psx, psx2 = pl.pallas_call(
        functools.partial(_stats_kernel, tile_rows=tile_rows, per_part=per_part,
                          rows=rows, need_guard=need_guard),
        out_shape=(jax.ShapeDtypeStruct((n_parts, 1, C), jnp.float32),
                   jax.ShapeDtypeStruct((n_parts, 1, C), jnp.float32)),
        grid=(n_parts, per_part),            # reduction axis innermost
        in_specs=[
            pl.BlockSpec((tile_rows, C), lambda p, ri: (row_block(p, ri), 0)),
            pl.BlockSpec((tile_rows, 1), lambda p, ri: (row_block(p, ri), 0)),
        ],
        out_specs=(pl.BlockSpec((1, 1, C), lambda p, ri: (p, 0, 0)),
                   pl.BlockSpec((1, 1, C), lambda p, ri: (p, 0, 0))),
        compiler_params=pltpu.CompilerParams(
            dimension_semantics=("parallel", "arbitrary"),
            vmem_limit_bytes=vmem_limit),
    )(x2, m_col)

    # Tiny (1, C) fold in plain JAX: combine parts, mean/var -> scale/shift.
    n = jnp.maximum(jnp.sum(m_col.astype(jnp.float32)), 1.0)
    mean = jnp.sum(psx, axis=0) / n                                   # (1, C)
    var = jnp.maximum(jnp.sum(psx2, axis=0) / n - mean * mean, 0.0)
    inv_std = jax.lax.rsqrt(var + eps)
    scale = w2 * inv_std
    shift = b2 - mean * scale

    # ---- Phase 2: normalize (fully parallel, lane-dense full-C slabs) -------
    # Last block may be partial: OOB writes are dropped by Pallas, and the
    # overhang rows are elementwise garbage that never touches valid rows.
    out = pl.pallas_call(
        _norm_kernel,
        out_shape=jax.ShapeDtypeStruct((rows, C), x.dtype),
        grid=(n_rtiles,),
        in_specs=[
            pl.BlockSpec((tile_rows, C), lambda ri: (ri, 0)),
            pl.BlockSpec((tile_rows, 1), lambda ri: (ri, 0)),
            pl.BlockSpec((1, C), lambda ri: (0, 0)),
            pl.BlockSpec((1, C), lambda ri: (0, 0)),
        ],
        out_specs=pl.BlockSpec((tile_rows, C), lambda ri: (ri, 0)),
        compiler_params=pltpu.CompilerParams(
            dimension_semantics=("parallel",),
            vmem_limit_bytes=vmem_limit),
    )(x2, m_col, scale, shift)

    return out.reshape(B, L, C)


def masked_batch_norm_1d_ref(x, input_mask, weight, bias, eps=EPS):
    """Pure-JAX reference mirroring the PyTorch forward (training mode)."""
    masked = x * input_mask
    n = input_mask.sum()
    mean = masked.sum(axis=(0, 1), keepdims=True) / n
    var = jnp.square((masked - mean) * input_mask).sum(axis=(0, 1), keepdims=True) / n
    normed = (masked - mean) / jnp.sqrt(var + eps)
    normed = normed * weight + bias
    return normed * input_mask


if __name__ == "__main__":
    key = jax.random.PRNGKey(0)

    def _check(B, L, C, *, block_rows=None, fused_threshold_bytes=2 * 1024 * 1024,
               random_affine=False, kidx=0):
        kx, km, kw, kb = jax.random.split(jax.random.fold_in(key, kidx), 4)
        x = jax.random.normal(kx, (B, L, C), dtype=jnp.float32)
        mask = (jax.random.uniform(km, (B, L, 1)) > 0.3).astype(jnp.float32)
        if random_affine:
            weight = 1.0 + 0.1 * jax.random.normal(kw, (1, C), dtype=jnp.float32)
            bias = 0.1 * jax.random.normal(kb, (1, C), dtype=jnp.float32)
        else:
            # reset_parameters(): weight = ones, bias = zeros
            weight = jnp.ones((1, C), dtype=jnp.float32)
            bias = jnp.zeros((1, C), dtype=jnp.float32)

        out = masked_batch_norm_1d(x, mask, weight, bias,
                                   block_rows=block_rows,
                                   fused_threshold_bytes=fused_threshold_bytes)
        out = jax.block_until_ready(out)
        ref = masked_batch_norm_1d_ref(x, mask, weight, bias)
        assert out.shape == (B, L, C)
        assert jnp.allclose(out, ref, atol=2e-5, rtol=2e-5), (
            f"mismatch vs reference for shape {(B, L, C)}")

    # Fused single-kernel path at the small shape the forward implies (B, L, C).
    _check(2, 8, 32, kidx=0)
    # Two-pass path, even row-tile split across the two partial reductions.
    _check(2, 128, 160, block_rows=128, fused_threshold_bytes=0,
           random_affine=True, kidx=1)
    # Two-pass path, ragged rows + odd tile count (clamped index map + guard).
    _check(2, 180, 160, block_rows=128, fused_threshold_bytes=0,
           random_affine=True, kidx=2)
    # Two-pass path, small C (masked lane stores) + non-128 row tile.
    _check(4, 100, 32, block_rows=64, fused_threshold_bytes=0, kidx=3)

    # Defaults: no mask, no affine params (mask -> ones, weight/bias -> I).
    kx = jax.random.fold_in(key, 99)
    x = jax.random.normal(kx, (2, 8, 32), dtype=jnp.float32)
    out = jax.block_until_ready(masked_batch_norm_1d(x))
    ref = masked_batch_norm_1d_ref(x, jnp.ones((2, 8, 1), jnp.float32),
                                   jnp.ones((1, 32), jnp.float32),
                                   jnp.zeros((1, 32), jnp.float32))
    assert jnp.allclose(out, ref, atol=2e-5, rtol=2e-5)

    print("KERNEL_OK")
</pallas_src>

<mosaic_0001>
module attributes {stable_mosaic.version = 11 : i64} {
  func.func @_fused_kernel(%arg0: memref<16x32xf32, #tpu.memory_space<vmem>>, %arg1: memref<16x1xf32, #tpu.memory_space<vmem>>, %arg2: memref<1x32xf32, #tpu.memory_space<vmem>>, %arg3: memref<1x32xf32, #tpu.memory_space<vmem>>, %arg4: memref<16x32xf32, #tpu.memory_space<vmem>>) attributes {dimension_semantics = [], scalar_prefetch = 0 : i64, scratch_operands = 0 : i64, tpu.core_type = #tpu.core_type<tc>} {
    %c0 = arith.constant 0 : index
    %c0_0 = arith.constant 0 : index
    %0 = vector.load %arg0[%c0, %c0_0] : memref<16x32xf32, #tpu.memory_space<vmem>>, vector<16x32xf32>
    %c0_1 = arith.constant 0 : index
    %c0_2 = arith.constant 0 : index
    %1 = vector.load %arg1[%c0_1, %c0_2] : memref<16x1xf32, #tpu.memory_space<vmem>>, vector<16x1xf32>
    %2 = vector.broadcast %1 : vector<16x1xf32> to vector<16x32xf32>
    %3 = arith.mulf %0, %2 : vector<16x32xf32>
    %cst = arith.constant dense<0.000000e+00> : vector<1xf32>
    %4 = vector.multi_reduction <add>, %1, %cst [0] : vector<16x1xf32> to vector<1xf32>
    %5 = vector.shape_cast %4 : vector<1xf32> to vector<1x1xf32>
    %cst_3 = arith.constant 1.000000e+00 : f32
    %6 = vector.broadcast %cst_3 : f32 to vector<1x1xf32>
    %7 = arith.maximumf %5, %6 : vector<1x1xf32>
    %cst_4 = arith.constant dense<0.000000e+00> : vector<32xf32>
    %8 = vector.multi_reduction <add>, %3, %cst_4 [0] : vector<16x32xf32> to vector<32xf32>
    %9 = vector.shape_cast %8 : vector<32xf32> to vector<1x32xf32>
    %10 = vector.broadcast %7 : vector<1x1xf32> to vector<1x32xf32>
    %11 = arith.divf %9, %10 : vector<1x32xf32>
    %12 = arith.mulf %3, %3 : vector<16x32xf32>
    %cst_5 = arith.constant dense<0.000000e+00> : vector<32xf32>
    %13 = vector.multi_reduction <add>, %12, %cst_5 [0] : vector<16x32xf32> to vector<32xf32>
    %14 = vector.shape_cast %13 : vector<32xf32> to vector<1x32xf32>
    %15 = vector.broadcast %7 : vector<1x1xf32> to vector<1x32xf32>
    %16 = arith.divf %14, %15 : vector<1x32xf32>
    %17 = arith.mulf %11, %11 : vector<1x32xf32>
    %18 = arith.subf %16, %17 : vector<1x32xf32>
    %cst_6 = arith.constant 0.000000e+00 : f32
    %19 = vector.broadcast %cst_6 : f32 to vector<1x32xf32>
    %20 = arith.maximumf %18, %19 : vector<1x32xf32>
    %cst_7 = arith.constant 9.99999974E-6 : f32
    %21 = vector.broadcast %cst_7 : f32 to vector<1x32xf32>
    %22 = arith.addf %20, %21 : vector<1x32xf32>
    %23 = math.rsqrt %22 : vector<1x32xf32>
    %c0_8 = arith.constant 0 : index
    %c0_9 = arith.constant 0 : index
    %24 = vector.load %arg2[%c0_8, %c0_9] : memref<1x32xf32, #tpu.memory_space<vmem>>, vector<1x32xf32>
    %25 = arith.mulf %24, %23 : vector<1x32xf32>
    %c0_10 = arith.constant 0 : index
    %c0_11 = arith.constant 0 : index
    %26 = vector.load %arg3[%c0_10, %c0_11] : memref<1x32xf32, #tpu.memory_space<vmem>>, vector<1x32xf32>
    %27 = arith.mulf %11, %25 : vector<1x32xf32>
    %28 = arith.subf %26, %27 : vector<1x32xf32>
    %29 = vector.broadcast %25 : vector<1x32xf32> to vector<16x32xf32>
    %30 = arith.mulf %0, %29 : vector<16x32xf32>
    %31 = vector.broadcast %28 : vector<1x32xf32> to vector<16x32xf32>
    %32 = arith.addf %30, %31 : vector<16x32xf32>
    %33 = vector.broadcast %1 : vector<16x1xf32> to vector<16x32xf32>
    %34 = arith.mulf %32, %33 : vector<16x32xf32>
    %c0_12 = arith.constant 0 : index
    %c0_13 = arith.constant 0 : index
    %35 = vector.load %arg4[%c0_12, %c0_13] : memref<16x32xf32, #tpu.memory_space<vmem>>, vector<16x32xf32>
    tpu.vector_store %arg4[%c0_12, %c0_13], %34 {strides = array<i32>} : memref<16x32xf32, #tpu.memory_space<vmem>>, vector<16x32xf32>,
    return
  }
}

</mosaic_0001>

<llo_original>
// kernel: tpu_custom_call.1
$region0: #{tpu_custom_call.1}
  #allocation0 [shape = 'u32[]', space=smem, size = 0x4, offset = 0x4, fixed_abs, tag = 'smem constant byte address 0x4 - core index']
  #allocation1 [shape = 'u32[144,128]{1,0:T(1,128)}', space=vmem, size = 0x12000, scoped, tag = 'internal scratch']
  %s0 = inlined_call_operand.vmem [shape: f32[16,32], index: 0, kind: input, shape index: {}]
  %s1 = inlined_call_operand.vmem [shape: f32[16,1], index: 1, kind: input, shape index: {}]
  %s2 = inlined_call_operand.vmem [shape: f32[1,32], index: 2, kind: input, shape index: {}]
  %s3 = inlined_call_operand.vmem [shape: f32[1,32], index: 3, kind: input, shape index: {}]
  %s4 = inlined_call_operand.hbm [shape: f32[16,32], index: 4, kind: output, shape index: {}]
  %s5 = sld [smem:[#allocation0]]
  $region26: #{tpu_custom_call.1} parent=0
    _
  %s7 = ssub.s32 1, %s5
  %s8 = scalar_select 0, %s7, %s5
  $region1: #{tpu_custom_call.1} parent=0
    #allocation2 [shape = 'u8[8192]{0}', space=vmem, size = 0x2000, scoped, tag = 'output window, operand 0, single buffered']
    #allocation3 [shape = 's32[1]{0}', space=sflag, size = 0x4, scoped, tag = 'scoped memory for tpu_custom_call.1']
    %9 = vsyncpa [#allocation3], 0
    // Predicated region
    $region2: #{tpu_custom_call.1} parent=1 // pred_check
      _
    $region3: #{tpu_custom_call.1} parent=1 // pred_check_branch
      %11 = sbr.rel (0) target = $region5
    $region4: #{tpu_custom_call.1} parent=1 // pred_region
      _
    $region5: #{tpu_custom_call.1} parent=1 // pred_fallthru
      _
    // Predicated region
    $region6: #{tpu_custom_call.1} parent=1 // pred_check
      _
    $region7: #{tpu_custom_call.1} parent=1 // pred_check_branch
      %13 = sbr.rel (0) target = $region9
    $region8: #{tpu_custom_call.1} parent=1 // pred_region
      _
    $region9: #{tpu_custom_call.1} parent=1 // pred_fallthru
      _
    // Predicated region
    $region10: #{tpu_custom_call.1} parent=1 // pred_check
      _
    $region11: #{tpu_custom_call.1} parent=1 // pred_check_branch
      %15 = sbr.rel (0) target = $region13
    $region12: #{tpu_custom_call.1} parent=1 // pred_region
      _
    $region13: #{tpu_custom_call.1} parent=1 // pred_fallthru
      _
    // Predicated region
    $region14: #{tpu_custom_call.1} parent=1 // pred_check
      _
    $region15: #{tpu_custom_call.1} parent=1 // pred_check_branch
      %17 = sbr.rel (0) target = $region17
    $region16: #{tpu_custom_call.1} parent=1 // pred_region
      _
    $region17: #{tpu_custom_call.1} parent=1 // pred_fallthru
      _
    %v18 = vld [vmem:[%s0] sm:$0xff]
    %v19 = vld [vmem:[%s0 + $0x8] sm:$0xff]
    %v20 = vld [vmem:[%s1] sm:$0xff]
    %v21 = vld [vmem:[%s1 + $0x8] sm:$0xff]
    %23 = vset.pattern.permute.xlu0 0
    %24 = vperm.xlu0 %23, %v20
    %v25 = vpop.permute.xlu0 %24
    %28 = vset.pattern.permute.xlu0 0
    %29 = vperm.xlu0 %28, %v21
    %v30 = vpop.permute.xlu0 %29
    %v32 = vmul.f32 %v18, %v25
    %v33 = vmul.f32 %v19, %v30
    %vm34 = vcmask 7168
    %v35 = vsel %vm34, %v20, 0.0
    %v36 = vsel %vm34, %v21, 0.0
    %v37 = vadd.f32 %v35, %v36
    %v38 = vrot.slane %v37, 4
    %v39 = vadd.f32 %v37, %v38
    %v40 = vrot.slane %v39, 2
    %v41 = vadd.f32 %v39, %v40
    %v42 = vrot.slane %v41, 1
    %v43 = vadd.f32 %v41, %v42
    %v44 = vmax.f32 %v43, 1.0
    %vm45 = vcmask 261120
    %v46 = vsel %vm45, %v32, 0.0
    %v47 = vsel %vm45, %v33, 0.0
    %v48 = vadd.f32 %v46, %v47
    %v49 = vrot.slane %v48, 4
    %v50 = vadd.f32 %v48, %v49
    %v51 = vrot.slane %v50, 2
    %v52 = vadd.f32 %v50, %v51
    %v53 = vrot.slane %v52, 1
    %v54 = vadd.f32 %v52, %v53
    %56 = vset.pattern.permute.xlu0 0
    %57 = vperm.xlu0 %56, %v44
    %v58 = vpop.permute.xlu0 %57
    %v60 = vrcp.pop %v58
    %v61 = vmul.f32 %v54, %v60
    %v62 = vmul.f32 %v32, %v32
    %v63 = vmul.f32 %v33, %v33
    %v64 = vsel %vm45, %v62, 0.0
    %v65 = vsel %vm45, %v63, 0.0
    %v66 = vadd.f32 %v64, %v65
    %v67 = vrot.slane %v66, 4
    %v68 = vadd.f32 %v66, %v67
    %v69 = vrot.slane %v68, 2
    %v70 = vadd.f32 %v68, %v69
    %v71 = vrot.slane %v70, 1
    %v72 = vadd.f32 %v70, %v71
    %v73 = vmul.f32 %v72, %v60
    %v74 = vmul.f32 %v61, %v61
    %v75 = vsub.f32 %v73, %v74
    %v76 = vmax.f32 %v75, 0.0
    %v77 = vadd.f32 %v76, 1e-05
    %v78 = vrsqrt.pop %v77
    %v79 = vld [vmem:[%s2] sm:$0x1]
    %v80 = vmul.f32 %v79, %v78
    %v81 = vld [vmem:[%s3] sm:$0x1]
    %v82 = vmul.f32 %v61, %v80
    %v83 = vsub.f32 %v81, %v82
    %v85 = vlaneseq
    %v86 = vshrl.u32 %v85, 7
    %v87 = vsub.s32 0, %v86
    %v88 = vrot.slane %v80, %v87
    %v90 = vmul.f32 %v18, %v88
    %v91 = vmul.f32 %v19, %v88
    %v93 = vlaneseq
    %v94 = vshrl.u32 %v93, 7
    %v95 = vsub.s32 0, %v94
    %v96 = vrot.slane %v83, %v95
    %v98 = vadd.f32 %v90, %v96
    %v99 = vadd.f32 %v91, %v96
    %v100 = vmul.f32 %v98, %v25
    %v101 = vmul.f32 %v99, %v30
    %102 = vst.msk [vmem:[#allocation2] sm:$0xff] %vm45, %v100
    %103 = vst.msk [vmem:[#allocation2 + $0x8] sm:$0xff] %vm45, %v101
    // Predicated region
    $region18: #{tpu_custom_call.1} parent=1 // pred_check
      _
    $region19: #{tpu_custom_call.1} parent=1 // pred_check_branch
      %105 = sbr.rel (0) target = $region21
    $region20: #{tpu_custom_call.1} parent=1 // pred_region
      %s107 = ssub.s32 256, 256
      %108 = vsyncadd [#allocation3], %s107
      %s109 = sshll.u32 [#allocation2], 4
      %s110 = int_to_ptr.vmem [resolvable:$true] %s109
      %115 = dma.vmem_to_hbm [thread:$0]  %s110, 256, %s4, [#allocation3], 128, 128, 8
    $region21: #{tpu_custom_call.1} parent=1 // pred_fallthru
      _
    // Predicated region
    $region22: #{tpu_custom_call.1} parent=1 // pred_check
      _
    $region23: #{tpu_custom_call.1} parent=1 // pred_check_branch
      %117 = sbr.rel (0) target = $region25
    $region24: #{tpu_custom_call.1} parent=1 // pred_region
      %118 = dma.done [#allocation3], 256
    $region25: #{tpu_custom_call.1} parent=1 // pred_fallthru
      _
    %119 = vsyncpa [#allocation3], 1

</llo_original>
